<compile_context>
chip_gen: v7x
topology: tpu7x:2x2x1
jax: 0.10.0
libtpu: 0.0.40
codegen_flags: <defaults>
</compile_context>

<pallas_src>
import functools

import jax
import jax.numpy as jnp
from jax.experimental import pallas as pl
from jax.experimental.pallas import tpu as pltpu


def _round_up(v, m):
    return (v + m - 1) // m * m


def _fused_gcn_kernel(*refs, n_layers):
    """All GCN layers fused; adj / activations / weights live in VMEM.

    refs layout (positional):
      adj_ref : (Np, Np)        bf16  symmetric-normalized adjacency (padded)
      x_ref   : (Np, Fin_p)     bf16  node features (padded, lane-dense)
      then per layer li: w_ref (Fin_p_li, Fout_p_li) bf16, b_ref (1, Fout_p_li) f32
      o_ref   : (Np, Cp)        f32   output slab (real logits in [:, :n_classes])
    """
    adj_ref = refs[0]
    x_ref = refs[1]
    o_ref = refs[2 + 2 * n_layers]

    adj = adj_ref[...]                       # hoisted once, reused every layer
    h = x_ref[...]                           # bf16 activations, stay on-chip
    for li in range(n_layers):               # static unroll (n_layers is small)
        w_ref = refs[2 + 2 * li]
        b_ref = refs[3 + 2 * li]
        # Feature transform on the MXU: (Np, Fin_p) @ (Fin_p, Fout_p), f32 acc.
        xw = jnp.dot(h, w_ref[...], preferred_element_type=jnp.float32)
        # Neighborhood aggregation on the MXU: (Np, Np) @ (Np, Fout_p), f32 acc.
        agg = jnp.dot(adj, xw.astype(jnp.bfloat16),
                      preferred_element_type=jnp.float32)
        hf = agg + b_ref[...]                # f32 epilogue (v5e-safe)
        if li < n_layers - 1:
            # ReLU in f32, then a single cast: halves live activation VMEM.
            h = jnp.maximum(hf, 0.0).astype(jnp.bfloat16)
        else:
            o_ref[...] = hf                  # lane-dense (Cp = 128) unmasked vst


def prepare_base_gcn(adj, params):
    """One-time padding / casting of adjacency and parameters.

    Zero-padding is exact: padded feature columns stay zero through every
    layer (zero W rows/cols, zero bias), padded adj rows/cols never touch
    real nodes, and the wrapper slices the real block out at the end.
    """
    n_nodes = adj.shape[0]
    n_layers = len(params)
    n_classes = params[-1][0].shape[1]
    fin = params[0][0].shape[0]

    n_pad = _round_up(max(n_nodes, 128), 128)         # lane/contraction dim
    in_pads = tuple(_round_up(max(w.shape[0], 128), 128) for (w, _) in params)
    out_pads = tuple(_round_up(max(w.shape[1], 128), 128) for (w, _) in params)

    adj_p = (jnp.zeros((n_pad, n_pad), jnp.float32)
             .at[:n_nodes, :n_nodes].set(adj).astype(jnp.bfloat16))
    ws, bs = [], []
    for (w, b), ip, op in zip(params, in_pads, out_pads):
        wp = (jnp.zeros((ip, op), jnp.float32)
              .at[:w.shape[0], :w.shape[1]].set(w).astype(jnp.bfloat16))
        bp = jnp.zeros((1, op), jnp.float32).at[0, :b.shape[0]].set(b)
        ws.append(wp)
        bs.append(bp)

    meta = dict(n_nodes=n_nodes, n_pad=n_pad, n_layers=n_layers,
                n_classes=n_classes, fin=fin, fin_pad=in_pads[0],
                in_pads=in_pads, out_pads=out_pads)
    return adj_p, tuple(ws), tuple(bs), meta


def make_base_gcn_forward(meta):
    """Builds a jitted forward(adj_p, ws, bs, x) -> (n_nodes, n_classes)."""
    n_nodes = meta["n_nodes"]
    n_pad = meta["n_pad"]
    n_layers = meta["n_layers"]
    n_classes = meta["n_classes"]
    fin = meta["fin"]
    fin_pad = meta["fin_pad"]
    in_pads = meta["in_pads"]
    out_pads = meta["out_pads"]
    c_pad = out_pads[-1]

    # Cost hint for XLA's scheduler (padded shapes).
    flops = sum(2 * n_pad * ip * op + 2 * n_pad * n_pad * op
                for ip, op in zip(in_pads, out_pads))
    bytes_accessed = (2 * n_pad * n_pad                        # adj bf16
                      + 2 * n_pad * fin_pad                    # x bf16
                      + sum(2 * ip * op + 4 * op
                            for ip, op in zip(in_pads, out_pads))
                      + 4 * n_pad * c_pad)                     # out f32
    cost = pl.CostEstimate(flops=flops, transcendentals=0,
                           bytes_accessed=bytes_accessed)

    # VMEM residency estimate: adj + x + params + output + live activations
    # (f32 agg + bf16 h), with 2x headroom; clamp to 64 MiB (v7x-safe).
    max_w = max(out_pads + (fin_pad,))
    residency = (2 * n_pad * n_pad
                 + 2 * n_pad * fin_pad
                 + sum(2 * ip * op + 4 * op
                       for ip, op in zip(in_pads, out_pads))
                 + 4 * n_pad * c_pad
                 + 6 * n_pad * max_w)
    vmem_limit = int(min(64 * 1024 * 1024,
                         max(2 * residency, 8 * 1024 * 1024)))

    kernel = functools.partial(_fused_gcn_kernel, n_layers=n_layers)
    vmem = pltpu.MemorySpace.VMEM
    n_inputs = 2 + 2 * n_layers

    call = pl.pallas_call(
        kernel,
        out_shape=jax.ShapeDtypeStruct((n_pad, c_pad), jnp.float32),
        in_specs=[pl.BlockSpec(memory_space=vmem)] * n_inputs,
        out_specs=pl.BlockSpec(memory_space=vmem),
        compiler_params=pltpu.CompilerParams(vmem_limit_bytes=vmem_limit),
        cost_estimate=cost,
    )

    def forward(adj_p, ws, bs, x):
        # Only the runtime feature matrix is padded per call.
        x_p = (jnp.zeros((n_pad, fin_pad), jnp.float32)
               .at[:n_nodes, :fin].set(x).astype(jnp.bfloat16))
        args = [adj_p, x_p]
        for w, b in zip(ws, bs):
            args.append(w)
            args.append(b)
        out = call(*args)
        return out[:n_nodes, :n_classes]
        # TODO(synk): fit()/Adam/CrossEntropy/mlflow logging and
        # predict_proba's softmax are out of scope for the forward kernel;
        # dropout is identity at inference.

    return jax.jit(forward)


def build_normalized_adjacency(n_nodes):
    """Deterministic synthetic ring graph, symmetric-normalized w/ self loops."""
    idx = jnp.arange(n_nodes)
    adj = jnp.zeros((n_nodes, n_nodes), jnp.float32)
    adj = adj.at[idx, (idx + 1) % n_nodes].set(1.0)
    adj = adj.at[(idx + 1) % n_nodes, idx].set(1.0)
    adj = adj + jnp.eye(n_nodes, dtype=jnp.float32)  # self loops
    deg = adj.sum(axis=1)
    d_inv_sqrt = 1.0 / jnp.sqrt(deg)
    return adj * d_inv_sqrt[:, None] * d_inv_sqrt[None, :]


def init_params(key, n_in_feats, n_hidden_feats, n_hidden_layers, n_classes=2):
    """Glorot-uniform-style init for each layer's (W, b)."""
    dims = [n_in_feats] + [n_hidden_feats] * (n_hidden_layers + 1) + [n_classes]
    params = []
    for fin, fout in zip(dims[:-1], dims[1:]):
        key, wk = jax.random.split(key)
        limit = jnp.sqrt(6.0 / (fin + fout))
        w = jax.random.uniform(wk, (fin, fout), jnp.float32, -limit, limit)
        b = jnp.zeros((fout,), jnp.float32)
        params.append((w, b))
    return params


def reference_forward_f32(adj, x, params):
    """Pure-JAX f32 reference."""
    h = x
    n_layers = len(params)
    for li, (w, b) in enumerate(params):
        h = adj @ (h @ w) + b[None, :]
        if li < n_layers - 1:
            h = jnp.maximum(h, 0.0)
    return h


def reference_forward_bf16(adj, x, params):
    """Pure-JAX reference with the same bf16-operand / f32-accumulate math."""
    h = x
    adj_bf = adj.astype(jnp.bfloat16)
    n_layers = len(params)
    for li, (w, b) in enumerate(params):
        xw = jnp.dot(h.astype(jnp.bfloat16), w.astype(jnp.bfloat16),
                     preferred_element_type=jnp.float32)
        h = jnp.dot(adj_bf, xw.astype(jnp.bfloat16),
                    preferred_element_type=jnp.float32) + b[None, :]
        if li < n_layers - 1:
            h = jnp.maximum(h, 0.0)
    return h


if __name__ == "__main__":
    # Small shapes implied by the module: n_nodes x n_in_feats features,
    # hidden width, a couple of hidden layers, n_classes = 2.
    n_nodes = 64
    n_in_feats = 32
    n_hidden_feats = 32
    n_hidden_layers = 2

    key = jax.random.PRNGKey(0)
    key, xk = jax.random.split(key)
    x = jax.random.normal(xk, (n_nodes, n_in_feats), jnp.float32)
    adj = build_normalized_adjacency(n_nodes)
    params = init_params(key, n_in_feats, n_hidden_feats, n_hidden_layers)

    # One-time padding / casting of adjacency + parameters, then a jitted
    # forward that is essentially a single pallas_call.
    adj_p, ws, bs, meta = prepare_base_gcn(adj, params)
    forward = make_base_gcn_forward(meta)

    out = forward(adj_p, ws, bs, x)
    out = jax.block_until_ready(out)

    assert out.shape == (n_nodes, 2)
    # Exactness vs. a reference doing the identical bf16-operand math.
    ref_bf16 = reference_forward_bf16(adj, x, params)
    assert jnp.allclose(out, ref_bf16, atol=1e-2, rtol=1e-2), (
        float(jnp.max(jnp.abs(out - ref_bf16))))
    # Quantization error bound vs. the full-f32 reference.
    ref_f32 = reference_forward_f32(adj, x, params)
    assert jnp.allclose(out, ref_f32, atol=1e-1, rtol=1e-1), (
        float(jnp.max(jnp.abs(out - ref_f32))))

    print("KERNEL_OK")
</pallas_src>

<mosaic_0001>
module attributes {stable_mosaic.version = 11 : i64} {
  func.func @_fused_gcn_kernel(%arg0: memref<128x128xbf16, #tpu.memory_space<vmem>>, %arg1: memref<128x128xbf16, #tpu.memory_space<vmem>>, %arg2: memref<128x128xbf16, #tpu.memory_space<vmem>>, %arg3: memref<1x128xf32, #tpu.memory_space<vmem>>, %arg4: memref<128x128xbf16, #tpu.memory_space<vmem>>, %arg5: memref<1x128xf32, #tpu.memory_space<vmem>>, %arg6: memref<128x128xbf16, #tpu.memory_space<vmem>>, %arg7: memref<1x128xf32, #tpu.memory_space<vmem>>, %arg8: memref<128x128xbf16, #tpu.memory_space<vmem>>, %arg9: memref<1x128xf32, #tpu.memory_space<vmem>>, %arg10: memref<128x128xf32, #tpu.memory_space<vmem>>) attributes {dimension_semantics = [], scalar_prefetch = 0 : i64, scratch_operands = 0 : i64, tpu.core_type = #tpu.core_type<tc>} {
    %c0 = arith.constant 0 : index
    %c0_0 = arith.constant 0 : index
    %0 = vector.load %arg0[%c0, %c0_0] : memref<128x128xbf16, #tpu.memory_space<vmem>>, vector<128x128xbf16>
    %c0_1 = arith.constant 0 : index
    %c0_2 = arith.constant 0 : index
    %1 = vector.load %arg1[%c0_1, %c0_2] : memref<128x128xbf16, #tpu.memory_space<vmem>>, vector<128x128xbf16>
    %c0_3 = arith.constant 0 : index
    %c0_4 = arith.constant 0 : index
    %2 = vector.load %arg2[%c0_3, %c0_4] : memref<128x128xbf16, #tpu.memory_space<vmem>>, vector<128x128xbf16>
    %cst = arith.constant dense<0.000000e+00> : vector<128x128xf32>
    %3 = tpu.matmul %1, %2, %cst {dimension_numbers = #tpu.dot_dimension_numbers<[1], [0], [0], [1], [0, 0, 1, 1], [], []>} : vector<128x128xbf16>, vector<128x128xbf16>, vector<128x128xf32> -> vector<128x128xf32>
    %4 = arith.truncf %3 : vector<128x128xf32> to vector<128x128xbf16>
    %cst_5 = arith.constant dense<0.000000e+00> : vector<128x128xf32>
    %5 = tpu.matmul %0, %4, %cst_5 {dimension_numbers = #tpu.dot_dimension_numbers<[1], [0], [0], [1], [0, 0, 1, 1], [], []>} : vector<128x128xbf16>, vector<128x128xbf16>, vector<128x128xf32> -> vector<128x128xf32>
    %c0_6 = arith.constant 0 : index
    %c0_7 = arith.constant 0 : index
    %6 = vector.load %arg3[%c0_6, %c0_7] : memref<1x128xf32, #tpu.memory_space<vmem>>, vector<1x128xf32>
    %7 = vector.broadcast %6 : vector<1x128xf32> to vector<128x128xf32>
    %8 = arith.addf %5, %7 : vector<128x128xf32>
    %cst_8 = arith.constant 0.000000e+00 : f32
    %9 = vector.broadcast %cst_8 : f32 to vector<128x128xf32>
    %10 = arith.maximumf %8, %9 : vector<128x128xf32>
    %11 = arith.truncf %10 : vector<128x128xf32> to vector<128x128xbf16>
    %c0_9 = arith.constant 0 : index
    %c0_10 = arith.constant 0 : index
    %12 = vector.load %arg4[%c0_9, %c0_10] : memref<128x128xbf16, #tpu.memory_space<vmem>>, vector<128x128xbf16>
    %cst_11 = arith.constant dense<0.000000e+00> : vector<128x128xf32>
    %13 = tpu.matmul %11, %12, %cst_11 {dimension_numbers = #tpu.dot_dimension_numbers<[1], [0], [0], [1], [0, 0, 1, 1], [], []>} : vector<128x128xbf16>, vector<128x128xbf16>, vector<128x128xf32> -> vector<128x128xf32>
    %14 = arith.truncf %13 : vector<128x128xf32> to vector<128x128xbf16>
    %cst_12 = arith.constant dense<0.000000e+00> : vector<128x128xf32>
    %15 = tpu.matmul %0, %14, %cst_12 {dimension_numbers = #tpu.dot_dimension_numbers<[1], [0], [0], [1], [0, 0, 1, 1], [], []>} : vector<128x128xbf16>, vector<128x128xbf16>, vector<128x128xf32> -> vector<128x128xf32>
    %c0_13 = arith.constant 0 : index
    %c0_14 = arith.constant 0 : index
    %16 = vector.load %arg5[%c0_13, %c0_14] : memref<1x128xf32, #tpu.memory_space<vmem>>, vector<1x128xf32>
    %17 = vector.broadcast %16 : vector<1x128xf32> to vector<128x128xf32>
    %18 = arith.addf %15, %17 : vector<128x128xf32>
    %cst_15 = arith.constant 0.000000e+00 : f32
    %19 = vector.broadcast %cst_15 : f32 to vector<128x128xf32>
    %20 = arith.maximumf %18, %19 : vector<128x128xf32>
    %21 = arith.truncf %20 : vector<128x128xf32> to vector<128x128xbf16>
    %c0_16 = arith.constant 0 : index
    %c0_17 = arith.constant 0 : index
    %22 = vector.load %arg6[%c0_16, %c0_17] : memref<128x128xbf16, #tpu.memory_space<vmem>>, vector<128x128xbf16>
    %cst_18 = arith.constant dense<0.000000e+00> : vector<128x128xf32>
    %23 = tpu.matmul %21, %22, %cst_18 {dimension_numbers = #tpu.dot_dimension_numbers<[1], [0], [0], [1], [0, 0, 1, 1], [], []>} : vector<128x128xbf16>, vector<128x128xbf16>, vector<128x128xf32> -> vector<128x128xf32>
    %24 = arith.truncf %23 : vector<128x128xf32> to vector<128x128xbf16>
    %cst_19 = arith.constant dense<0.000000e+00> : vector<128x128xf32>
    %25 = tpu.matmul %0, %24, %cst_19 {dimension_numbers = #tpu.dot_dimension_numbers<[1], [0], [0], [1], [0, 0, 1, 1], [], []>} : vector<128x128xbf16>, vector<128x128xbf16>, vector<128x128xf32> -> vector<128x128xf32>
    %c0_20 = arith.constant 0 : index
    %c0_21 = arith.constant 0 : index
    %26 = vector.load %arg7[%c0_20, %c0_21] : memref<1x128xf32, #tpu.memory_space<vmem>>, vector<1x128xf32>
    %27 = vector.broadcast %26 : vector<1x128xf32> to vector<128x128xf32>
    %28 = arith.addf %25, %27 : vector<128x128xf32>
    %cst_22 = arith.constant 0.000000e+00 : f32
    %29 = vector.broadcast %cst_22 : f32 to vector<128x128xf32>
    %30 = arith.maximumf %28, %29 : vector<128x128xf32>
    %31 = arith.truncf %30 : vector<128x128xf32> to vector<128x128xbf16>
    %c0_23 = arith.constant 0 : index
    %c0_24 = arith.constant 0 : index
    %32 = vector.load %arg8[%c0_23, %c0_24] : memref<128x128xbf16, #tpu.memory_space<vmem>>, vector<128x128xbf16>
    %cst_25 = arith.constant dense<0.000000e+00> : vector<128x128xf32>
    %33 = tpu.matmul %31, %32, %cst_25 {dimension_numbers = #tpu.dot_dimension_numbers<[1], [0], [0], [1], [0, 0, 1, 1], [], []>} : vector<128x128xbf16>, vector<128x128xbf16>, vector<128x128xf32> -> vector<128x128xf32>
    %34 = arith.truncf %33 : vector<128x128xf32> to vector<128x128xbf16>
    %cst_26 = arith.constant dense<0.000000e+00> : vector<128x128xf32>
    %35 = tpu.matmul %0, %34, %cst_26 {dimension_numbers = #tpu.dot_dimension_numbers<[1], [0], [0], [1], [0, 0, 1, 1], [], []>} : vector<128x128xbf16>, vector<128x128xbf16>, vector<128x128xf32> -> vector<128x128xf32>
    %c0_27 = arith.constant 0 : index
    %c0_28 = arith.constant 0 : index
    %36 = vector.load %arg9[%c0_27, %c0_28] : memref<1x128xf32, #tpu.memory_space<vmem>>, vector<1x128xf32>
    %37 = vector.broadcast %36 : vector<1x128xf32> to vector<128x128xf32>
    %38 = arith.addf %35, %37 : vector<128x128xf32>
    %c0_29 = arith.constant 0 : index
    %c0_30 = arith.constant 0 : index
    %39 = vector.load %arg10[%c0_29, %c0_30] : memref<128x128xf32, #tpu.memory_space<vmem>>, vector<128x128xf32>
    tpu.vector_store %arg10[%c0_29, %c0_30], %38 {strides = array<i32>} : memref<128x128xf32, #tpu.memory_space<vmem>>, vector<128x128xf32>,
    return
  }
}

</mosaic_0001>

<llo_original>
// kernel: forward.1
$region0: #{forward.1}
  #allocation0 [shape = 'u32[]', space=smem, size = 0x4, offset = 0x4, fixed_abs, tag = 'smem constant byte address 0x4 - core index']
  #allocation1 [shape = 'u32[144,128]{1,0:T(1,128)}', space=vmem, size = 0x12000, scoped, tag = 'internal scratch']
  %s0 = inlined_call_operand.vmem [shape: bf16[128,128], index: 0, kind: input, shape index: {}]
  %s1 = inlined_call_operand.vmem [shape: bf16[128,128], index: 1, kind: input, shape index: {}]
  %s2 = inlined_call_operand.vmem [shape: bf16[128,128], index: 2, kind: input, shape index: {}]
  %s3 = inlined_call_operand.vmem [shape: f32[1,128], index: 3, kind: input, shape index: {}]
  %s4 = inlined_call_operand.vmem [shape: bf16[128,128], index: 4, kind: input, shape index: {}]
  %s5 = inlined_call_operand.vmem [shape: f32[1,128], index: 5, kind: input, shape index: {}]
  %s6 = inlined_call_operand.hbm [shape: bf16[128,128], index: 6, kind: input, shape index: {}]
  %s7 = inlined_call_operand.vmem [shape: f32[1,128], index: 7, kind: input, shape index: {}]
  %s8 = inlined_call_operand.hbm [shape: bf16[128,128], index: 8, kind: input, shape index: {}]
  %s9 = inlined_call_operand.hbm [shape: f32[1,128], index: 9, kind: input, shape index: {}]
  %s10 = inlined_call_operand.vmem [shape: f32[128,128], index: 10, kind: output, shape index: {}]
  %s11 = sld [smem:[#allocation0]]
  $region62: #{forward.1} parent=0
    _
  %s13 = ssub.s32 1, %s11
  %s14 = scalar_select 0, %s13, %s11
  $region1: #{forward.1} parent=0
    #allocation2 [shape = 'u8[32768]{0}', space=vmem, size = 0x8000, scoped, tag = 'input window, operand 6, single buffered']
    #allocation3 [shape = 's32[1]{0}', space=sflag, size = 0x4, scoped, tag = 'scoped memory for forward.1']
    #allocation4 [shape = 'u8[32768]{0}', space=vmem, size = 0x8000, scoped, tag = 'input window, operand 8, single buffered']
    #allocation5 [shape = 's32[1]{0}', space=sflag, size = 0x4, scoped, tag = 'scoped memory for forward.1']
    #allocation6 [shape = 'u8[512]{0}', space=vmem, size = 0x400, scoped, tag = 'input window, operand 9, single buffered']
    %15 = vsyncpa [#allocation3], 0
    %16 = vsyncpa [#allocation5], 0
    // Predicated region
    $region2: #{forward.1} parent=1 // pred_check
      _
    $region3: #{forward.1} parent=1 // pred_check_branch
      %18 = sbr.rel (0) target = $region5
    $region4: #{forward.1} parent=1 // pred_region
      _
    $region5: #{forward.1} parent=1 // pred_fallthru
      _
    // Predicated region
    $region6: #{forward.1} parent=1 // pred_check
      _
    $region7: #{forward.1} parent=1 // pred_check_branch
      %20 = sbr.rel (0) target = $region9
    $region8: #{forward.1} parent=1 // pred_region
      _
    $region9: #{forward.1} parent=1 // pred_fallthru
      _
    // Predicated region
    $region10: #{forward.1} parent=1 // pred_check
      _
    $region11: #{forward.1} parent=1 // pred_check_branch
      %22 = sbr.rel (0) target = $region13
    $region12: #{forward.1} parent=1 // pred_region
      _
    $region13: #{forward.1} parent=1 // pred_fallthru
      _
    // Predicated region
    $region14: #{forward.1} parent=1 // pred_check
      _
    $region15: #{forward.1} parent=1 // pred_check_branch
      %24 = sbr.rel (0) target = $region17
    $region16: #{forward.1} parent=1 // pred_region
      _
    $region17: #{forward.1} parent=1 // pred_fallthru
      _
    // Predicated region
    $region18: #{forward.1} parent=1 // pred_check
      _
    $region19: #{forward.1} parent=1 // pred_check_branch
      %26 = sbr.rel (0) target = $region21
    $region20: #{forward.1} parent=1 // pred_region
      _
    $region21: #{forward.1} parent=1 // pred_fallthru
      _
    // Predicated region
    $region22: #{forward.1} parent=1 // pred_check
      _
    $region23: #{forward.1} parent=1 // pred_check_branch
      %28 = sbr.rel (0) target = $region25
    $region24: #{forward.1} parent=1 // pred_region
      _
    $region25: #{forward.1} parent=1 // pred_fallthru
      _
    // Predicated region
    $region26: #{forward.1} parent=1 // pred_check
      _
    $region27: #{forward.1} parent=1 // pred_check_branch
      %30 = sbr.rel (0) target = $region29
    $region28: #{forward.1} parent=1 // pred_region
      %s32 = ssub.s32 1024, 1024
      %33 = vsyncadd [#allocation3], %s32
      %s34 = sshll.u32 [#allocation2], 4
      %s35 = int_to_ptr.vmem [resolvable:$true] %s34
      %40 = dma.hbm_to_vmem [thread:$0]  %s6, 1024, %s35, [#allocation3], 64, 64, 4
    $region29: #{forward.1} parent=1 // pred_fallthru
      _
    // Predicated region
    $region30: #{forward.1} parent=1 // pred_check
      _
    $region31: #{forward.1} parent=1 // pred_check_branch
      %42 = sbr.rel (0) target = $region33
    $region32: #{forward.1} parent=1 // pred_region
      _
    $region33: #{forward.1} parent=1 // pred_fallthru
      _
    // Predicated region
    $region34: #{forward.1} parent=1 // pred_check
      _
    $region35: #{forward.1} parent=1 // pred_check_branch
      %44 = sbr.rel (0) target = $region37
    $region36: #{forward.1} parent=1 // pred_region
      %s46 = ssub.s32 1024, 1024
      %47 = vsyncadd [#allocation5], %s46
      %s48 = sshll.u32 [#allocation4], 4
      %s49 = int_to_ptr.vmem [resolvable:$true] %s48
      %54 = dma.hbm_to_vmem [thread:$0]  %s8, 1024, %s49, [#allocation5], 64, 64, 4
    $region37: #{forward.1} parent=1 // pred_fallthru
      _
    // Predicated region
    $region38: #{forward.1} parent=1 // pred_check
      _
    $region39: #{forward.1} parent=1 // pred_check_branch
      %56 = sbr.rel (0) target = $region41
    $region40: #{forward.1} parent=1 // pred_region
      %s58 = ssub.s32 16, 16
      %59 = vsyncadd [#allocation5], %s58
      %s61 = sshll.u32 [#allocation6], 4
      %s62 = int_to_ptr.vmem [resolvable:$true] %s61
      %64 = dma.hbm_to_vmem [thread:$0]  %s9, 16, %s62, [#allocation5]
    $region41: #{forward.1} parent=1 // pred_fallthru
      _
    // Predicated region
    $region42: #{forward.1} parent=1 // pred_check
      _
    $region43: #{forward.1} parent=1 // pred_check_branch
      %66 = sbr.rel (0) target = $region45
    $region44: #{forward.1} parent=1 // pred_region
      %67 = dma.done [#allocation3], 1024
    $region45: #{forward.1} parent=1 // pred_fallthru
      _
    // Predicated region
    $region46: #{forward.1} parent=1 // pred_check
      _
    $region47: #{forward.1} parent=1 // pred_check_branch
      %69 = sbr.rel (0) target = $region49
    $region48: #{forward.1} parent=1 // pred_region
      %70 = dma.done [#allocation5], 1024
    $region49: #{forward.1} parent=1 // pred_fallthru
      _
    // Predicated region
    $region50: #{forward.1} parent=1 // pred_check
      _
    $region51: #{forward.1} parent=1 // pred_check_branch
      %72 = sbr.rel (0) target = $region53
    $region52: #{forward.1} parent=1 // pred_region
      %73 = dma.done [#allocation5], 16
    $region53: #{forward.1} parent=1 // pred_fallthru
      _
    %v75 = vld [vmem:[%s0] sm:$0xf]
    %v76 = vld [vmem:[%s0 + $0x4] sm:$0xf]
    %v77 = vld [vmem:[%s0 + $0x8] sm:$0xf]
    %v78 = vld [vmem:[%s0 + $0xc] sm:$0xf]
    %v79 = vld [vmem:[%s0 + $0x10] sm:$0xf]
    %v80 = vld [vmem:[%s0 + $0x14] sm:$0xf]
    %v81 = vld [vmem:[%s0 + $0x18] sm:$0xf]
    %v82 = vld [vmem:[%s0 + $0x1c] sm:$0xf]
    %v83 = vld [vmem:[%s0 + $0x20] sm:$0xf]
    %v84 = vld [vmem:[%s0 + $0x24] sm:$0xf]
    %v85 = vld [vmem:[%s0 + $0x28] sm:$0xf]
    %v86 = vld [vmem:[%s0 + $0x2c] sm:$0xf]
    %v87 = vld [vmem:[%s0 + $0x30] sm:$0xf]
    %v88 = vld [vmem:[%s0 + $0x34] sm:$0xf]
    %v89 = vld [vmem:[%s0 + $0x38] sm:$0xf]
    %v90 = vld [vmem:[%s0 + $0x3c] sm:$0xf]
    %v91 = vld [vmem:[%s1] sm:$0xf]
    %v92 = vld [vmem:[%s1 + $0x4] sm:$0xf]
    %v93 = vld [vmem:[%s1 + $0x8] sm:$0xf]
    %v94 = vld [vmem:[%s1 + $0xc] sm:$0xf]
    %v95 = vld [vmem:[%s1 + $0x10] sm:$0xf]
    %v96 = vld [vmem:[%s1 + $0x14] sm:$0xf]
    %v97 = vld [vmem:[%s1 + $0x18] sm:$0xf]
    %v98 = vld [vmem:[%s1 + $0x1c] sm:$0xf]
    %v99 = vld [vmem:[%s1 + $0x20] sm:$0xf]
    %v100 = vld [vmem:[%s1 + $0x24] sm:$0xf]
    %v101 = vld [vmem:[%s1 + $0x28] sm:$0xf]
    %v102 = vld [vmem:[%s1 + $0x2c] sm:$0xf]
    %v103 = vld [vmem:[%s1 + $0x30] sm:$0xf]
    %v104 = vld [vmem:[%s1 + $0x34] sm:$0xf]
    %v105 = vld [vmem:[%s1 + $0x38] sm:$0xf]
    %v106 = vld [vmem:[%s1 + $0x3c] sm:$0xf]
    %v107 = vld [vmem:[%s2] sm:$0xf]
    %v108 = vld [vmem:[%s2 + $0x4] sm:$0xf]
    %v109 = vld [vmem:[%s2 + $0x8] sm:$0xf]
    %v110 = vld [vmem:[%s2 + $0xc] sm:$0xf]
    %v111 = vld [vmem:[%s2 + $0x10] sm:$0xf]
    %v112 = vld [vmem:[%s2 + $0x14] sm:$0xf]
    %v113 = vld [vmem:[%s2 + $0x18] sm:$0xf]
    %v114 = vld [vmem:[%s2 + $0x1c] sm:$0xf]
    %v115 = vld [vmem:[%s2 + $0x20] sm:$0xf]
    %v116 = vld [vmem:[%s2 + $0x24] sm:$0xf]
    %v117 = vld [vmem:[%s2 + $0x28] sm:$0xf]
    %v118 = vld [vmem:[%s2 + $0x2c] sm:$0xf]
    %v119 = vld [vmem:[%s2 + $0x30] sm:$0xf]
    %v120 = vld [vmem:[%s2 + $0x34] sm:$0xf]
    %v121 = vld [vmem:[%s2 + $0x38] sm:$0xf]
    %v122 = vld [vmem:[%s2 + $0x3c] sm:$0xf]
    %v139 = vunpack.c.l.b16 %v91
    %v140 = vunpack.c.l.b16 %v92
    %v141 = vunpack.c.l.b16 %v93
    %v142 = vunpack.c.l.b16 %v94
    %v143 = vunpack.c.l.b16 %v95
    %v144 = vunpack.c.l.b16 %v96
    %v145 = vunpack.c.l.b16 %v97
    %v146 = vunpack.c.l.b16 %v98
    %v147 = vunpack.c.l.b16 %v99
    %v148 = vunpack.c.l.b16 %v100
    %v149 = vunpack.c.l.b16 %v101
    %v150 = vunpack.c.l.b16 %v102
    %v151 = vunpack.c.l.b16 %v103
    %v152 = vunpack.c.l.b16 %v104
    %v153 = vunpack.c.l.b16 %v105
    %v154 = vunpack.c.l.b16 %v106
    %v155 = vpack.c.b16 %v140, %v139
    %v156 = vpack.c.b16 %v142, %v141
    %v157 = vpack.c.b16 %v144, %v143
    %v158 = vpack.c.b16 %v146, %v145
    %v159 = vpack.c.b16 %v148, %v147
    %v160 = vpack.c.b16 %v150, %v149
    %v161 = vpack.c.b16 %v152, %v151
    %v162 = vpack.c.b16 %v154, %v153
    %v187 = vunpack.c.l.b16 %v107
    %v188 = vunpack.c.l.b16 %v108
    %v189 = vunpack.c.l.b16 %v109
    %v190 = vunpack.c.l.b16 %v110
    %v191 = vunpack.c.l.b16 %v111
    %v192 = vunpack.c.l.b16 %v112
    %v193 = vunpack.c.l.b16 %v113
    %v194 = vunpack.c.l.b16 %v114
    %v195 = vunpack.c.l.b16 %v115
    %v196 = vunpack.c.l.b16 %v116
    %v197 = vunpack.c.l.b16 %v117
    %v198 = vunpack.c.l.b16 %v118
    %v199 = vunpack.c.l.b16 %v119
    %v200 = vunpack.c.l.b16 %v120
    %v201 = vunpack.c.l.b16 %v121
    %v202 = vunpack.c.l.b16 %v122
    %v203 = vpack.c.b16 %v188, %v187
    %v204 = vpack.c.b16 %v190, %v189
    %v205 = vpack.c.b16 %v192, %v191
    %v206 = vpack.c.b16 %v194, %v193
    %v207 = vpack.c.b16 %v196, %v195
    %v208 = vpack.c.b16 %v198, %v197
    %v209 = vpack.c.b16 %v200, %v199
    %v210 = vpack.c.b16 %v202, %v201
    %219 = vmatprep.subr.bf16.mxu0 0
    %220 = vmatpush1.bf16.msra.mxu0 %v203
    %221 = vmatprep.subr.bf16.mxu0 0
    %222 = vmatpush1.bf16.msra.mxu0 %v204
    %223 = vmatprep.subr.bf16.mxu0 0
    %224 = vmatpush1.bf16.msra.mxu0 %v205
    %225 = vmatprep.subr.bf16.mxu0 0
    %226 = vmatpush1.bf16.msra.mxu0 %v206
    %227 = vmatprep.subr.bf16.mxu0 0
    %228 = vmatpush1.bf16.msra.mxu0 %v207
    %229 = vmatprep.subr.bf16.mxu0 0
    %230 = vmatpush1.bf16.msra.mxu0 %v208
    %231 = vmatprep.subr.bf16.mxu0 0
    %232 = vmatpush1.bf16.msra.mxu0 %v209
    %233 = vmatprep.subr.bf16.mxu0 0
    %234 = vmatpush1.bf16.msra.mxu0 %v210
    %235 = vmatprep.subr.bf16.mxu0 0
    %236 = vmatpush1.bf16.msra.mxu0 0
    %237 = vmatprep.subr.bf16.mxu0 0
    %238 = vmatpush1.bf16.msra.mxu0 0
    %239 = vmatprep.subr.bf16.mxu0 0
    %240 = vmatpush1.bf16.msra.mxu0 0
    %241 = vmatprep.subr.bf16.mxu0 0
    %242 = vmatpush1.bf16.msra.mxu0 0
    %243 = vmatprep.subr.bf16.mxu0 0
    %244 = vmatpush1.bf16.msra.mxu0 0
    %245 = vmatprep.subr.bf16.mxu0 0
    %246 = vmatpush1.bf16.msra.mxu0 0
    %247 = vmatprep.subr.bf16.mxu0 0
    %248 = vmatpush1.bf16.msra.mxu0 0
    %249 = vmatprep.subr.bf16.mxu0 0
    %250 = vmatpush1.bf16.msra.mxu0 0
    %251 = vmatprep.mubr.bf16.mxu0 0
    %252 = vmatmul.mubr.bf16.gmra.mrb[0].mxu0 %v155
    %v253 = vpop.f32.mrb[0].mxu0
    %v254 = vadd.f32 0.0, %v253
    %v255 = vpop.f32.mrb[0].mxu0
    %v256 = vpop.f32.mrb[0].mxu0
    %v257 = vadd.f32 0.0, %v256
    %v258 = vpop.f32.mrb[0].mxu0
    %259 = vmatprep.mubr.bf16.mxu0 0
    %260 = vmatmul.mubr.bf16.gmra.mrb[0].mxu0 %v156
    %v261 = vpop.f32.mrb[0].mxu0
    %v262 = vadd.f32 0.0, %v261
    %v263 = vpop.f32.mrb[0].mxu0
    %v264 = vpop.f32.mrb[0].mxu0
    %v265 = vadd.f32 0.0, %v264
    %v266 = vpop.f32.mrb[0].mxu0
    %267 = vmatprep.mubr.bf16.mxu0 0
    %268 = vmatmul.mubr.bf16.gmra.mrb[0].mxu0 %v157
    %v269 = vpop.f32.mrb[0].mxu0
    %v270 = vadd.f32 0.0, %v269
    %v271 = vpop.f32.mrb[0].mxu0
    %v272 = vpop.f32.mrb[0].mxu0
    %v273 = vadd.f32 0.0, %v272
    %v274 = vpop.f32.mrb[0].mxu0
    %275 = vmatprep.mubr.bf16.mxu0 0
    %276 = vmatmul.mubr.bf16.gmra.mrb[0].mxu0 %v158
    %v277 = vpop.f32.mrb[0].mxu0
    %v278 = vadd.f32 0.0, %v277
    %v279 = vpop.f32.mrb[0].mxu0
    %v280 = vpop.f32.mrb[0].mxu0
    %v281 = vadd.f32 0.0, %v280
    %v282 = vpop.f32.mrb[0].mxu0
    %283 = vmatprep.mubr.bf16.mxu0 0
    %284 = vmatmul.mubr.bf16.gmra.mrb[0].mxu0 %v159
    %v285 = vpop.f32.mrb[0].mxu0
    %v286 = vadd.f32 0.0, %v285
    %v287 = vpop.f32.mrb[0].mxu0
    %v288 = vpop.f32.mrb[0].mxu0
    %v289 = vadd.f32 0.0, %v288
    %v290 = vpop.f32.mrb[0].mxu0
    %291 = vmatprep.mubr.bf16.mxu0 0
    %292 = vmatmul.mubr.bf16.gmra.mrb[0].mxu0 %v160
    %v293 = vpop.f32.mrb[0].mxu0
    %v294 = vadd.f32 0.0, %v293
    %v295 = vpop.f32.mrb[0].mxu0
    %v296 = vpop.f32.mrb[0].mxu0
    %v297 = vadd.f32 0.0, %v296
    %v298 = vpop.f32.mrb[0].mxu0
    %299 = vmatprep.mubr.bf16.mxu0 0
    %300 = vmatmul.mubr.bf16.gmra.mrb[0].mxu0 %v161
    %v301 = vpop.f32.mrb[0].mxu0
    %v302 = vadd.f32 0.0, %v301
    %v303 = vpop.f32.mrb[0].mxu0
    %v304 = vpop.f32.mrb[0].mxu0
    %v305 = vadd.f32 0.0, %v304
    %v306 = vpop.f32.mrb[0].mxu0
    %307 = vmatprep.mubr.bf16.mxu0 0
    %308 = vmatmul.mubr.bf16.gmra.mrb[0].mxu0 %v162
    %v309 = vpop.f32.mrb[0].mxu0
    %v310 = vadd.f32 0.0, %v309
    %v311 = vpop.f32.mrb[0].mxu0
    %v312 = vpop.f32.mrb[0].mxu0
    %v313 = vadd.f32 0.0, %v312
    %v314 = vpop.f32.mrb[0].mxu0
    %315 = vdwg.mxu0
    %v316 = vpack.c.bf16 %v257, %v254
    %v317 = vpack.c.bf16 %v265, %v262
    %v318 = vpack.c.bf16 %v273, %v270
    %v319 = vpack.c.bf16 %v281, %v278
    %v320 = vpack.c.bf16 %v289, %v286
    %v321 = vpack.c.bf16 %v297, %v294
    %v322 = vpack.c.bf16 %v305, %v302
    %v323 = vpack.c.bf16 %v313, %v310
    %v324 = vld [vmem:[%s3] sm:$0x1]
    %v326 = vlaneseq
    %v327 = vshrl.u32 %v326, 7
    %v328 = vsub.s32 0, %v327
    %v329 = vrot.slane %v324, %v328
    %v347 = vunpack.c.l.b16 %v75
    %v348 = vunpack.c.l.b16 %v76
    %v349 = vunpack.c.l.b16 %v77
    %v350 = vunpack.c.l.b16 %v78
    %v351 = vunpack.c.l.b16 %v79
    %v352 = vunpack.c.l.b16 %v80
    %v353 = vunpack.c.l.b16 %v81
    %v354 = vunpack.c.l.b16 %v82
    %v355 = vunpack.c.l.b16 %v83
    %v356 = vunpack.c.l.b16 %v84
    %v357 = vunpack.c.l.b16 %v85
    %v358 = vunpack.c.l.b16 %v86
    %v359 = vunpack.c.l.b16 %v87
    %v360 = vunpack.c.l.b16 %v88
    %v361 = vunpack.c.l.b16 %v89
    %v362 = vunpack.c.l.b16 %v90
    %v363 = vpack.c.b16 %v348, %v347
    %v364 = vpack.c.b16 %v350, %v349
    %v365 = vpack.c.b16 %v352, %v351
    %v366 = vpack.c.b16 %v354, %v353
    %v367 = vpack.c.b16 %v356, %v355
    %v368 = vpack.c.b16 %v358, %v357
    %v369 = vpack.c.b16 %v360, %v359
    %v370 = vpack.c.b16 %v362, %v361
    %379 = vmatprep.subr.bf16.mxu0 0
    %380 = vmatpush1.bf16.msra.mxu0 %v316
    %381 = vmatprep.subr.bf16.mxu0 0
    %382 = vmatpush1.bf16.msra.mxu0 %v317
    %383 = vmatprep.subr.bf16.mxu0 0
    %384 = vmatpush1.bf16.msra.mxu0 %v318
    %385 = vmatprep.subr.bf16.mxu0 0
    %386 = vmatpush1.bf16.msra.mxu0 %v319
    %387 = vmatprep.subr.bf16.mxu0 0
    %388 = vmatpush1.bf16.msra.mxu0 %v320
    %389 = vmatprep.subr.bf16.mxu0 0
    %390 = vmatpush1.bf16.msra.mxu0 %v321
    %391 = vmatprep.subr.bf16.mxu0 0
    %392 = vmatpush1.bf16.msra.mxu0 %v322
    %393 = vmatprep.subr.bf16.mxu0 0
    %394 = vmatpush1.bf16.msra.mxu0 %v323
    %395 = vmatprep.subr.bf16.mxu0 0
    %396 = vmatpush1.bf16.msra.mxu0 0
    %397 = vmatprep.subr.bf16.mxu0 0
    %398 = vmatpush1.bf16.msra.mxu0 0
    %399 = vmatprep.subr.bf16.mxu0 0
    %400 = vmatpush1.bf16.msra.mxu0 0
    %401 = vmatprep.subr.bf16.mxu0 0
    %402 = vmatpush1.bf16.msra.mxu0 0
    %403 = vmatprep.subr.bf16.mxu0 0
    %404 = vmatpush1.bf16.msra.mxu0 0
    %405 = vmatprep.subr.bf16.mxu0 0
    %406 = vmatpush1.bf16.msra.mxu0 0
    %407 = vmatprep.subr.bf16.mxu0 0
    %408 = vmatpush1.bf16.msra.mxu0 0
    %409 = vmatprep.subr.bf16.mxu0 0
    %410 = vmatpush1.bf16.msra.mxu0 0
    %411 = vmatprep.mubr.bf16.mxu0 0
    %412 = vmatmul.mubr.bf16.gmra.mrb[0].mxu0 %v363
    %v413 = vpop.f32.mrb[0].mxu0
    %v414 = vadd.f32 %v329, %v413
    %v415 = vpop.f32.mrb[0].mxu0
    %v416 = vpop.f32.mrb[0].mxu0
    %v417 = vadd.f32 %v329, %v416
    %v418 = vpop.f32.mrb[0].mxu0
    %419 = vmatprep.mubr.bf16.mxu0 0
    %420 = vmatmul.mubr.bf16.gmra.mrb[0].mxu0 %v364
    %v421 = vpop.f32.mrb[0].mxu0
    %v422 = vadd.f32 %v329, %v421
    %v423 = vpop.f32.mrb[0].mxu0
    %v424 = vpop.f32.mrb[0].mxu0
    %v425 = vadd.f32 %v329, %v424
    %v426 = vpop.f32.mrb[0].mxu0
    %427 = vmatprep.mubr.bf16.mxu0 0
    %428 = vmatmul.mubr.bf16.gmra.mrb[0].mxu0 %v365
    %v429 = vpop.f32.mrb[0].mxu0
    %v430 = vadd.f32 %v329, %v429
    %v431 = vpop.f32.mrb[0].mxu0
    %v432 = vpop.f32.mrb[0].mxu0
    %v433 = vadd.f32 %v329, %v432
    %v434 = vpop.f32.mrb[0].mxu0
    %435 = vmatprep.mubr.bf16.mxu0 0
    %436 = vmatmul.mubr.bf16.gmra.mrb[0].mxu0 %v366
    %v437 = vpop.f32.mrb[0].mxu0
    %v438 = vadd.f32 %v329, %v437
    %v439 = vpop.f32.mrb[0].mxu0
    %v440 = vpop.f32.mrb[0].mxu0
    %v441 = vadd.f32 %v329, %v440
    %v442 = vpop.f32.mrb[0].mxu0
    %443 = vmatprep.mubr.bf16.mxu0 0
    %444 = vmatmul.mubr.bf16.gmra.mrb[0].mxu0 %v367
    %v445 = vpop.f32.mrb[0].mxu0
    %v446 = vadd.f32 %v329, %v445
    %v447 = vpop.f32.mrb[0].mxu0
    %v448 = vpop.f32.mrb[0].mxu0
    %v449 = vadd.f32 %v329, %v448
    %v450 = vpop.f32.mrb[0].mxu0
    %451 = vmatprep.mubr.bf16.mxu0 0
    %452 = vmatmul.mubr.bf16.gmra.mrb[0].mxu0 %v368
    %v453 = vpop.f32.mrb[0].mxu0
    %v454 = vadd.f32 %v329, %v453
    %v455 = vpop.f32.mrb[0].mxu0
    %v456 = vpop.f32.mrb[0].mxu0
    %v457 = vadd.f32 %v329, %v456
    %v458 = vpop.f32.mrb[0].mxu0
    %459 = vmatprep.mubr.bf16.mxu0 0
    %460 = vmatmul.mubr.bf16.gmra.mrb[0].mxu0 %v369
    %v461 = vpop.f32.mrb[0].mxu0
    %v462 = vadd.f32 %v329, %v461
    %v463 = vpop.f32.mrb[0].mxu0
    %v464 = vpop.f32.mrb[0].mxu0
    %v465 = vadd.f32 %v329, %v464
    %v466 = vpop.f32.mrb[0].mxu0
    %467 = vmatprep.mubr.bf16.mxu0 0
    %468 = vmatmul.mubr.bf16.gmra.mrb[0].mxu0 %v370
    %v469 = vpop.f32.mrb[0].mxu0
    %v470 = vadd.f32 %v329, %v469
    %v471 = vpop.f32.mrb[0].mxu0
    %v472 = vpop.f32.mrb[0].mxu0
    %v473 = vadd.f32 %v329, %v472
    %v474 = vpop.f32.mrb[0].mxu0
    %475 = vdwg.mxu0
    %v476 = vmax.f32 %v414, 0.0
    %v477 = vmax.f32 %v417, 0.0
    %v478 = vmax.f32 %v422, 0.0
    %v479 = vmax.f32 %v425, 0.0
    %v480 = vmax.f32 %v430, 0.0
    %v481 = vmax.f32 %v433, 0.0
    %v482 = vmax.f32 %v438, 0.0
    %v483 = vmax.f32 %v441, 0.0
    %v484 = vmax.f32 %v446, 0.0
    %v485 = vmax.f32 %v449, 0.0
    %v486 = vmax.f32 %v454, 0.0
    %v487 = vmax.f32 %v457, 0.0
    %v488 = vmax.f32 %v462, 0.0
    %v489 = vmax.f32 %v465, 0.0
    %v490 = vmax.f32 %v470, 0.0
    %v491 = vmax.f32 %v473, 0.0
    %v492 = vpack.c.bf16 %v477, %v476
    %v493 = vpack.c.bf16 %v479, %v478
    %v494 = vpack.c.bf16 %v481, %v480
    %v495 = vpack.c.bf16 %v483, %v482
    %v496 = vpack.c.bf16 %v485, %v484
    %v497 = vpack.c.bf16 %v487, %v486
    %v498 = vpack.c.bf16 %v489, %v488
    %v499 = vpack.c.bf16 %v491, %v490
    %v500 = vld [vmem:[%s4] sm:$0xf]
    %v501 = vld [vmem:[%s4 + $0x4] sm:$0xf]
    %v502 = vld [vmem:[%s4 + $0x8] sm:$0xf]
    %v503 = vld [vmem:[%s4 + $0xc] sm:$0xf]
    %v504 = vld [vmem:[%s4 + $0x10] sm:$0xf]
    %v505 = vld [vmem:[%s4 + $0x14] sm:$0xf]
    %v506 = vld [vmem:[%s4 + $0x18] sm:$0xf]
    %v507 = vld [vmem:[%s4 + $0x1c] sm:$0xf]
    %v508 = vld [vmem:[%s4 + $0x20] sm:$0xf]
    %v509 = vld [vmem:[%s4 + $0x24] sm:$0xf]
    %v510 = vld [vmem:[%s4 + $0x28] sm:$0xf]
    %v511 = vld [vmem:[%s4 + $0x2c] sm:$0xf]
    %v512 = vld [vmem:[%s4 + $0x30] sm:$0xf]
    %v513 = vld [vmem:[%s4 + $0x34] sm:$0xf]
    %v514 = vld [vmem:[%s4 + $0x38] sm:$0xf]
    %v515 = vld [vmem:[%s4 + $0x3c] sm:$0xf]
    %v532 = vunpack.c.l.b16 %v500
    %v533 = vunpack.c.l.b16 %v501
    %v534 = vunpack.c.l.b16 %v502
    %v535 = vunpack.c.l.b16 %v503
    %v536 = vunpack.c.l.b16 %v504
    %v537 = vunpack.c.l.b16 %v505
    %v538 = vunpack.c.l.b16 %v506
    %v539 = vunpack.c.l.b16 %v507
    %v540 = vunpack.c.l.b16 %v508
    %v541 = vunpack.c.l.b16 %v509
    %v542 = vunpack.c.l.b16 %v510
    %v543 = vunpack.c.l.b16 %v511
    %v544 = vunpack.c.l.b16 %v512
    %v545 = vunpack.c.l.b16 %v513
    %v546 = vunpack.c.l.b16 %v514
    %v547 = vunpack.c.l.b16 %v515
    %v548 = vpack.c.b16 %v533, %v532
    %v549 = vpack.c.b16 %v535, %v534
    %v550 = vpack.c.b16 %v537, %v536
    %v551 = vpack.c.b16 %v539, %v538
    %v552 = vpack.c.b16 %v541, %v540
    %v553 = vpack.c.b16 %v543, %v542
    %v554 = vpack.c.b16 %v545, %v544
    %v555 = vpack.c.b16 %v547, %v546
    %564 = vmatprep.subr.bf16.mxu0 0
    %565 = vmatpush1.bf16.msra.mxu0 %v548
    %566 = vmatprep.subr.bf16.mxu0 0
    %567 = vmatpush1.bf16.msra.mxu0 %v549
    %568 = vmatprep.subr.bf16.mxu0 0
    %569 = vmatpush1.bf16.msra.mxu0 %v550
    %570 = vmatprep.subr.bf16.mxu0 0
    %571 = vmatpush1.bf16.msra.mxu0 %v551
    %572 = vmatprep.subr.bf16.mxu0 0
    %573 = vmatpush1.bf16.msra.mxu0 %v552
    %574 = vmatprep.subr.bf16.mxu0 0
    %575 = vmatpush1.bf16.msra.mxu0 %v553
    %576 = vmatprep.subr.bf16.mxu0 0
    %577 = vmatpush1.bf16.msra.mxu0 %v554
    %578 = vmatprep.subr.bf16.mxu0 0
    %579 = vmatpush1.bf16.msra.mxu0 %v555
    %580 = vmatprep.subr.bf16.mxu0 0
    %581 = vmatpush1.bf16.msra.mxu0 0
    %582 = vmatprep.subr.bf16.mxu0 0
    %583 = vmatpush1.bf16.msra.mxu0 0
    %584 = vmatprep.subr.bf16.mxu0 0
    %585 = vmatpush1.bf16.msra.mxu0 0
    %586 = vmatprep.subr.bf16.mxu0 0
    %587 = vmatpush1.bf16.msra.mxu0 0
    %588 = vmatprep.subr.bf16.mxu0 0
    %589 = vmatpush1.bf16.msra.mxu0 0
    %590 = vmatprep.subr.bf16.mxu0 0
    %591 = vmatpush1.bf16.msra.mxu0 0
    %592 = vmatprep.subr.bf16.mxu0 0
    %593 = vmatpush1.bf16.msra.mxu0 0
    %594 = vmatprep.subr.bf16.mxu0 0
    %595 = vmatpush1.bf16.msra.mxu0 0
    %596 = vmatprep.mubr.bf16.mxu0 0
    %597 = vmatmul.mubr.bf16.gmra.mrb[0].mxu0 %v492
    %v598 = vpop.f32.mrb[0].mxu0
    %v599 = vadd.f32 0.0, %v598
    %v600 = vpop.f32.mrb[0].mxu0
    %v601 = vpop.f32.mrb[0].mxu0
    %v602 = vadd.f32 0.0, %v601
    %v603 = vpop.f32.mrb[0].mxu0
    %604 = vmatprep.mubr.bf16.mxu0 0
    %605 = vmatmul.mubr.bf16.gmra.mrb[0].mxu0 %v493
    %v606 = vpop.f32.mrb[0].mxu0
    %v607 = vadd.f32 0.0, %v606
    %v608 = vpop.f32.mrb[0].mxu0
    %v609 = vpop.f32.mrb[0].mxu0
    %v610 = vadd.f32 0.0, %v609
    %v611 = vpop.f32.mrb[0].mxu0
    %612 = vmatprep.mubr.bf16.mxu0 0
    %613 = vmatmul.mubr.bf16.gmra.mrb[0].mxu0 %v494
    %v614 = vpop.f32.mrb[0].mxu0
    %v615 = vadd.f32 0.0, %v614
    %v616 = vpop.f32.mrb[0].mxu0
    %v617 = vpop.f32.mrb[0].mxu0
    %v618 = vadd.f32 0.0, %v617
    %v619 = vpop.f32.mrb[0].mxu0
    %620 = vmatprep.mubr.bf16.mxu0 0
    %621 = vmatmul.mubr.bf16.gmra.mrb[0].mxu0 %v495
    %v622 = vpop.f32.mrb[0].mxu0
    %v623 = vadd.f32 0.0, %v622
    %v624 = vpop.f32.mrb[0].mxu0
    %v625 = vpop.f32.mrb[0].mxu0
    %v626 = vadd.f32 0.0, %v625
    %v627 = vpop.f32.mrb[0].mxu0
    %628 = vmatprep.mubr.bf16.mxu0 0
    %629 = vmatmul.mubr.bf16.gmra.mrb[0].mxu0 %v496
    %v630 = vpop.f32.mrb[0].mxu0
    %v631 = vadd.f32 0.0, %v630
    %v632 = vpop.f32.mrb[0].mxu0
    %v633 = vpop.f32.mrb[0].mxu0
    %v634 = vadd.f32 0.0, %v633
    %v635 = vpop.f32.mrb[0].mxu0
    %636 = vmatprep.mubr.bf16.mxu0 0
    %637 = vmatmul.mubr.bf16.gmra.mrb[0].mxu0 %v497
    %v638 = vpop.f32.mrb[0].mxu0
    %v639 = vadd.f32 0.0, %v638
    %v640 = vpop.f32.mrb[0].mxu0
    %v641 = vpop.f32.mrb[0].mxu0
    %v642 = vadd.f32 0.0, %v641
    %v643 = vpop.f32.mrb[0].mxu0
    %644 = vmatprep.mubr.bf16.mxu0 0
    %645 = vmatmul.mubr.bf16.gmra.mrb[0].mxu0 %v498
    %v646 = vpop.f32.mrb[0].mxu0
    %v647 = vadd.f32 0.0, %v646
    %v648 = vpop.f32.mrb[0].mxu0
    %v649 = vpop.f32.mrb[0].mxu0
    %v650 = vadd.f32 0.0, %v649
    %v651 = vpop.f32.mrb[0].mxu0
    %652 = vmatprep.mubr.bf16.mxu0 0
    %653 = vmatmul.mubr.bf16.gmra.mrb[0].mxu0 %v499
    %v654 = vpop.f32.mrb[0].mxu0
    %v655 = vadd.f32 0.0, %v654
    %v656 = vpop.f32.mrb[0].mxu0
    %v657 = vpop.f32.mrb[0].mxu0
    %v658 = vadd.f32 0.0, %v657
    %v659 = vpop.f32.mrb[0].mxu0
    %660 = vdwg.mxu0
    %v661 = vpack.c.bf16 %v602, %v599
    %v662 = vpack.c.bf16 %v610, %v607
    %v663 = vpack.c.bf16 %v618, %v615
    %v664 = vpack.c.bf16 %v626, %v623
    %v665 = vpack.c.bf16 %v634, %v631
    %v666 = vpack.c.bf16 %v642, %v639
    %v667 = vpack.c.bf16 %v650, %v647
    %v668 = vpack.c.bf16 %v658, %v655
    %v669 = vld [vmem:[%s5] sm:$0x1]
    %v671 = vlaneseq
    %v672 = vshrl.u32 %v671, 7
    %v673 = vsub.s32 0, %v672
    %v674 = vrot.slane %v669, %v673
    %676 = vmatprep.subr.bf16.mxu0 0
    %677 = vmatpush1.bf16.msra.mxu0 %v661
    %678 = vmatprep.subr.bf16.mxu0 0
    %679 = vmatpush1.bf16.msra.mxu0 %v662
    %680 = vmatprep.subr.bf16.mxu0 0
    %681 = vmatpush1.bf16.msra.mxu0 %v663
    %682 = vmatprep.subr.bf16.mxu0 0
    %683 = vmatpush1.bf16.msra.mxu0 %v664
    %684 = vmatprep.subr.bf16.mxu0 0
    %685 = vmatpush1.bf16.msra.mxu0 %v665
    %686 = vmatprep.subr.bf16.mxu0 0
    %687 = vmatpush1.bf16.msra.mxu0 %v666
    %688 = vmatprep.subr.bf16.mxu0 0
    %689 = vmatpush1.bf16.msra.mxu0 %v667
    %690 = vmatprep.subr.bf16.mxu0 0
    %691 = vmatpush1.bf16.msra.mxu0 %v668
    %692 = vmatprep.subr.bf16.mxu0 0
    %693 = vmatpush1.bf16.msra.mxu0 0
    %694 = vmatprep.subr.bf16.mxu0 0
    %695 = vmatpush1.bf16.msra.mxu0 0
    %696 = vmatprep.subr.bf16.mxu0 0
    %697 = vmatpush1.bf16.msra.mxu0 0
    %698 = vmatprep.subr.bf16.mxu0 0
    %699 = vmatpush1.bf16.msra.mxu0 0
    %700 = vmatprep.subr.bf16.mxu0 0
    %701 = vmatpush1.bf16.msra.mxu0 0
    %702 = vmatprep.subr.bf16.mxu0 0
    %703 = vmatpush1.bf16.msra.mxu0 0
    %704 = vmatprep.subr.bf16.mxu0 0
    %705 = vmatpush1.bf16.msra.mxu0 0
    %706 = vmatprep.subr.bf16.mxu0 0
    %707 = vmatpush1.bf16.msra.mxu0 0
    %708 = vmatprep.mubr.bf16.mxu0 0
    %709 = vmatmul.mubr.bf16.gmra.mrb[0].mxu0 %v363
    %v710 = vpop.f32.mrb[0].mxu0
    %v711 = vadd.f32 %v674, %v710
    %v712 = vpop.f32.mrb[0].mxu0
    %v713 = vpop.f32.mrb[0].mxu0
    %v714 = vadd.f32 %v674, %v713
    %v715 = vpop.f32.mrb[0].mxu0
    %716 = vmatprep.mubr.bf16.mxu0 0
    %717 = vmatmul.mubr.bf16.gmra.mrb[0].mxu0 %v364
    %v718 = vpop.f32.mrb[0].mxu0
    %v719 = vadd.f32 %v674, %v718
    %v720 = vpop.f32.mrb[0].mxu0
    %v721 = vpop.f32.mrb[0].mxu0
    %v722 = vadd.f32 %v674, %v721
    %v723 = vpop.f32.mrb[0].mxu0
    %724 = vmatprep.mubr.bf16.mxu0 0
    %725 = vmatmul.mubr.bf16.gmra.mrb[0].mxu0 %v365
    %v726 = vpop.f32.mrb[0].mxu0
    %v727 = vadd.f32 %v674, %v726
    %v728 = vpop.f32.mrb[0].mxu0
    %v729 = vpop.f32.mrb[0].mxu0
    %v730 = vadd.f32 %v674, %v729
    %v731 = vpop.f32.mrb[0].mxu0
    %732 = vmatprep.mubr.bf16.mxu0 0
    %733 = vmatmul.mubr.bf16.gmra.mrb[0].mxu0 %v366
    %v734 = vpop.f32.mrb[0].mxu0
    %v735 = vadd.f32 %v674, %v734
    %v736 = vpop.f32.mrb[0].mxu0
    %v737 = vpop.f32.mrb[0].mxu0
    %v738 = vadd.f32 %v674, %v737
    %v739 = vpop.f32.mrb[0].mxu0
    %740 = vmatprep.mubr.bf16.mxu0 0
    %741 = vmatmul.mubr.bf16.gmra.mrb[0].mxu0 %v367
    %v742 = vpop.f32.mrb[0].mxu0
    %v743 = vadd.f32 %v674, %v742
    %v744 = vpop.f32.mrb[0].mxu0
    %v745 = vpop.f32.mrb[0].mxu0
    %v746 = vadd.f32 %v674, %v745
    %v747 = vpop.f32.mrb[0].mxu0
    %748 = vmatprep.mubr.bf16.mxu0 0
    %749 = vmatmul.mubr.bf16.gmra.mrb[0].mxu0 %v368
    %v750 = vpop.f32.mrb[0].mxu0
    %v751 = vadd.f32 %v674, %v750
    %v752 = vpop.f32.mrb[0].mxu0
    %v753 = vpop.f32.mrb[0].mxu0
    %v754 = vadd.f32 %v674, %v753
    %v755 = vpop.f32.mrb[0].mxu0
    %756 = vmatprep.mubr.bf16.mxu0 0
    %757 = vmatmul.mubr.bf16.gmra.mrb[0].mxu0 %v369
    %v758 = vpop.f32.mrb[0].mxu0
    %v759 = vadd.f32 %v674, %v758
    %v760 = vpop.f32.mrb[0].mxu0
    %v761 = vpop.f32.mrb[0].mxu0
    %v762 = vadd.f32 %v674, %v761
    %v763 = vpop.f32.mrb[0].mxu0
    %764 = vmatprep.mubr.bf16.mxu0 0
    %765 = vmatmul.mubr.bf16.gmra.mrb[0].mxu0 %v370
    %v766 = vpop.f32.mrb[0].mxu0
    %v767 = vadd.f32 %v674, %v766
    %v768 = vpop.f32.mrb[0].mxu0
    %v769 = vpop.f32.mrb[0].mxu0
    %v770 = vadd.f32 %v674, %v769
    %v771 = vpop.f32.mrb[0].mxu0
    %772 = vdwg.mxu0
    %v773 = vmax.f32 %v711, 0.0
    %v774 = vmax.f32 %v714, 0.0
    %v775 = vmax.f32 %v719, 0.0
    %v776 = vmax.f32 %v722, 0.0
    %v777 = vmax.f32 %v727, 0.0
    %v778 = vmax.f32 %v730, 0.0
    %v779 = vmax.f32 %v735, 0.0
    %v780 = vmax.f32 %v738, 0.0
    %v781 = vmax.f32 %v743, 0.0
    %v782 = vmax.f32 %v746, 0.0
    %v783 = vmax.f32 %v751, 0.0
    %v784 = vmax.f32 %v754, 0.0
    %v785 = vmax.f32 %v759, 0.0
    %v786 = vmax.f32 %v762, 0.0
    %v787 = vmax.f32 %v767, 0.0
    %v788 = vmax.f32 %v770, 0.0
    %v789 = vpack.c.bf16 %v774, %v773
    %v790 = vpack.c.bf16 %v776, %v775
    %v791 = vpack.c.bf16 %v778, %v777
    %v792 = vpack.c.bf16 %v780, %v779
    %v793 = vpack.c.bf16 %v782, %v781
    %v794 = vpack.c.bf16 %v784, %v783
    %v795 = vpack.c.bf16 %v786, %v785
    %v796 = vpack.c.bf16 %v788, %v787
    %v797 = vld [vmem:[#allocation2] sm:$0xf]
    %v798 = vld [vmem:[#allocation2 + $0x4] sm:$0xf]
    %v799 = vld [vmem:[#allocation2 + $0x8] sm:$0xf]
    %v800 = vld [vmem:[#allocation2 + $0xc] sm:$0xf]
    %v801 = vld [vmem:[#allocation2 + $0x10] sm:$0xf]
    %v802 = vld [vmem:[#allocation2 + $0x14] sm:$0xf]
    %v803 = vld [vmem:[#allocation2 + $0x18] sm:$0xf]
    %v804 = vld [vmem:[#allocation2 + $0x1c] sm:$0xf]
    %v805 = vld [vmem:[#allocation2 + $0x20] sm:$0xf]
    %v806 = vld [vmem:[#allocation2 + $0x24] sm:$0xf]
    %v807 = vld [vmem:[#allocation2 + $0x28] sm:$0xf]
    %v808 = vld [vmem:[#allocation2 + $0x2c] sm:$0xf]
    %v809 = vld [vmem:[#allocation2 + $0x30] sm:$0xf]
    %v810 = vld [vmem:[#allocation2 + $0x34] sm:$0xf]
    %v811 = vld [vmem:[#allocation2 + $0x38] sm:$0xf]
    %v812 = vld [vmem:[#allocation2 + $0x3c] sm:$0xf]
    %v829 = vunpack.c.l.b16 %v797
    %v830 = vunpack.c.l.b16 %v798
    %v831 = vunpack.c.l.b16 %v799
    %v832 = vunpack.c.l.b16 %v800
    %v833 = vunpack.c.l.b16 %v801
    %v834 = vunpack.c.l.b16 %v802
    %v835 = vunpack.c.l.b16 %v803
    %v836 = vunpack.c.l.b16 %v804
    %v837 = vunpack.c.l.b16 %v805
    %v838 = vunpack.c.l.b16 %v806
    %v839 = vunpack.c.l.b16 %v807
    %v840 = vunpack.c.l.b16 %v808
    %v841 = vunpack.c.l.b16 %v809
    %v842 = vunpack.c.l.b16 %v810
    %v843 = vunpack.c.l.b16 %v811
    %v844 = vunpack.c.l.b16 %v812
    %v845 = vpack.c.b16 %v830, %v829
    %v846 = vpack.c.b16 %v832, %v831
    %v847 = vpack.c.b16 %v834, %v833
    %v848 = vpack.c.b16 %v836, %v835
    %v849 = vpack.c.b16 %v838, %v837
    %v850 = vpack.c.b16 %v840, %v839
    %v851 = vpack.c.b16 %v842, %v841
    %v852 = vpack.c.b16 %v844, %v843
    %861 = vmatprep.subr.bf16.mxu0 0
    %862 = vmatpush1.bf16.msra.mxu0 %v845
    %863 = vmatprep.subr.bf16.mxu0 0
    %864 = vmatpush1.bf16.msra.mxu0 %v846
    %865 = vmatprep.subr.bf16.mxu0 0
    %866 = vmatpush1.bf16.msra.mxu0 %v847
    %867 = vmatprep.subr.bf16.mxu0 0
    %868 = vmatpush1.bf16.msra.mxu0 %v848
    %869 = vmatprep.subr.bf16.mxu0 0
    %870 = vmatpush1.bf16.msra.mxu0 %v849
    %871 = vmatprep.subr.bf16.mxu0 0
    %872 = vmatpush1.bf16.msra.mxu0 %v850
    %873 = vmatprep.subr.bf16.mxu0 0
    %874 = vmatpush1.bf16.msra.mxu0 %v851
    %875 = vmatprep.subr.bf16.mxu0 0
    %876 = vmatpush1.bf16.msra.mxu0 %v852
    %877 = vmatprep.subr.bf16.mxu0 0
    %878 = vmatpush1.bf16.msra.mxu0 0
    %879 = vmatprep.subr.bf16.mxu0 0
    %880 = vmatpush1.bf16.msra.mxu0 0
    %881 = vmatprep.subr.bf16.mxu0 0
    %882 = vmatpush1.bf16.msra.mxu0 0
    %883 = vmatprep.subr.bf16.mxu0 0
    %884 = vmatpush1.bf16.msra.mxu0 0
    %885 = vmatprep.subr.bf16.mxu0 0
    %886 = vmatpush1.bf16.msra.mxu0 0
    %887 = vmatprep.subr.bf16.mxu0 0
    %888 = vmatpush1.bf16.msra.mxu0 0
    %889 = vmatprep.subr.bf16.mxu0 0
    %890 = vmatpush1.bf16.msra.mxu0 0
    %891 = vmatprep.subr.bf16.mxu0 0
    %892 = vmatpush1.bf16.msra.mxu0 0
    %893 = vmatprep.mubr.bf16.mxu0 0
    %894 = vmatmul.mubr.bf16.gmra.mrb[0].mxu0 %v789
    %v895 = vpop.f32.mrb[0].mxu0
    %v896 = vadd.f32 0.0, %v895
    %v897 = vpop.f32.mrb[0].mxu0
    %v898 = vpop.f32.mrb[0].mxu0
    %v899 = vadd.f32 0.0, %v898
    %v900 = vpop.f32.mrb[0].mxu0
    %901 = vmatprep.mubr.bf16.mxu0 0
    %902 = vmatmul.mubr.bf16.gmra.mrb[0].mxu0 %v790
    %v903 = vpop.f32.mrb[0].mxu0
    %v904 = vadd.f32 0.0, %v903
    %v905 = vpop.f32.mrb[0].mxu0
    %v906 = vpop.f32.mrb[0].mxu0
    %v907 = vadd.f32 0.0, %v906
    %v908 = vpop.f32.mrb[0].mxu0
    %909 = vmatprep.mubr.bf16.mxu0 0
    %910 = vmatmul.mubr.bf16.gmra.mrb[0].mxu0 %v791
    %v911 = vpop.f32.mrb[0].mxu0
    %v912 = vadd.f32 0.0, %v911
    %v913 = vpop.f32.mrb[0].mxu0
    %v914 = vpop.f32.mrb[0].mxu0
    %v915 = vadd.f32 0.0, %v914
    %v916 = vpop.f32.mrb[0].mxu0
    %917 = vmatprep.mubr.bf16.mxu0 0
    %918 = vmatmul.mubr.bf16.gmra.mrb[0].mxu0 %v792
    %v919 = vpop.f32.mrb[0].mxu0
    %v920 = vadd.f32 0.0, %v919
    %v921 = vpop.f32.mrb[0].mxu0
    %v922 = vpop.f32.mrb[0].mxu0
    %v923 = vadd.f32 0.0, %v922
    %v924 = vpop.f32.mrb[0].mxu0
    %925 = vmatprep.mubr.bf16.mxu0 0
    %926 = vmatmul.mubr.bf16.gmra.mrb[0].mxu0 %v793
    %v927 = vpop.f32.mrb[0].mxu0
    %v928 = vadd.f32 0.0, %v927
    %v929 = vpop.f32.mrb[0].mxu0
    %v930 = vpop.f32.mrb[0].mxu0
    %v931 = vadd.f32 0.0, %v930
    %v932 = vpop.f32.mrb[0].mxu0
    %933 = vmatprep.mubr.bf16.mxu0 0
    %934 = vmatmul.mubr.bf16.gmra.mrb[0].mxu0 %v794
    %v935 = vpop.f32.mrb[0].mxu0
    %v936 = vadd.f32 0.0, %v935
    %v937 = vpop.f32.mrb[0].mxu0
    %v938 = vpop.f32.mrb[0].mxu0
    %v939 = vadd.f32 0.0, %v938
    %v940 = vpop.f32.mrb[0].mxu0
    %941 = vmatprep.mubr.bf16.mxu0 0
    %942 = vmatmul.mubr.bf16.gmra.mrb[0].mxu0 %v795
    %v943 = vpop.f32.mrb[0].mxu0
    %v944 = vadd.f32 0.0, %v943
    %v945 = vpop.f32.mrb[0].mxu0
    %v946 = vpop.f32.mrb[0].mxu0
    %v947 = vadd.f32 0.0, %v946
    %v948 = vpop.f32.mrb[0].mxu0
    %949 = vmatprep.mubr.bf16.mxu0 0
    %950 = vmatmul.mubr.bf16.gmra.mrb[0].mxu0 %v796
    %v951 = vpop.f32.mrb[0].mxu0
    %v952 = vadd.f32 0.0, %v951
    %v953 = vpop.f32.mrb[0].mxu0
    %v954 = vpop.f32.mrb[0].mxu0
    %v955 = vadd.f32 0.0, %v954
    %v956 = vpop.f32.mrb[0].mxu0
    %957 = vdwg.mxu0
    %v958 = vpack.c.bf16 %v899, %v896
    %v959 = vpack.c.bf16 %v907, %v904
    %v960 = vpack.c.bf16 %v915, %v912
    %v961 = vpack.c.bf16 %v923, %v920
    %v962 = vpack.c.bf16 %v931, %v928
    %v963 = vpack.c.bf16 %v939, %v936
    %v964 = vpack.c.bf16 %v947, %v944
    %v965 = vpack.c.bf16 %v955, %v952
    %v966 = vld [vmem:[%s7] sm:$0x1]
    %v968 = vlaneseq
    %v969 = vshrl.u32 %v968, 7
    %v970 = vsub.s32 0, %v969
    %v971 = vrot.slane %v966, %v970
    %973 = vmatprep.subr.bf16.mxu0 0
    %974 = vmatpush1.bf16.msra.mxu0 %v958
    %975 = vmatprep.subr.bf16.mxu0 0
    %976 = vmatpush1.bf16.msra.mxu0 %v959
    %977 = vmatprep.subr.bf16.mxu0 0
    %978 = vmatpush1.bf16.msra.mxu0 %v960
    %979 = vmatprep.subr.bf16.mxu0 0
    %980 = vmatpush1.bf16.msra.mxu0 %v961
    %981 = vmatprep.subr.bf16.mxu0 0
    %982 = vmatpush1.bf16.msra.mxu0 %v962
    %983 = vmatprep.subr.bf16.mxu0 0
    %984 = vmatpush1.bf16.msra.mxu0 %v963
    %985 = vmatprep.subr.bf16.mxu0 0
    %986 = vmatpush1.bf16.msra.mxu0 %v964
    %987 = vmatprep.subr.bf16.mxu0 0
    %988 = vmatpush1.bf16.msra.mxu0 %v965
    %989 = vmatprep.subr.bf16.mxu0 0
    %990 = vmatpush1.bf16.msra.mxu0 0
    %991 = vmatprep.subr.bf16.mxu0 0
    %992 = vmatpush1.bf16.msra.mxu0 0
    %993 = vmatprep.subr.bf16.mxu0 0
    %994 = vmatpush1.bf16.msra.mxu0 0
    %995 = vmatprep.subr.bf16.mxu0 0
    %996 = vmatpush1.bf16.msra.mxu0 0
    %997 = vmatprep.subr.bf16.mxu0 0
    %998 = vmatpush1.bf16.msra.mxu0 0
    %999 = vmatprep.subr.bf16.mxu0 0
    %1000 = vmatpush1.bf16.msra.mxu0 0
    %1001 = vmatprep.subr.bf16.mxu0 0
    %1002 = vmatpush1.bf16.msra.mxu0 0
    %1003 = vmatprep.subr.bf16.mxu0 0
    %1004 = vmatpush1.bf16.msra.mxu0 0
    %1005 = vmatprep.mubr.bf16.mxu0 0
    %1006 = vmatmul.mubr.bf16.gmra.mrb[0].mxu0 %v363
    %v1007 = vpop.f32.mrb[0].mxu0
    %v1008 = vadd.f32 %v971, %v1007
    %v1009 = vpop.f32.mrb[0].mxu0
    %v1010 = vpop.f32.mrb[0].mxu0
    %v1011 = vadd.f32 %v971, %v1010
    %v1012 = vpop.f32.mrb[0].mxu0
    %1013 = vmatprep.mubr.bf16.mxu0 0
    %1014 = vmatmul.mubr.bf16.gmra.mrb[0].mxu0 %v364
    %v1015 = vpop.f32.mrb[0].mxu0
    %v1016 = vadd.f32 %v971, %v1015
    %v1017 = vpop.f32.mrb[0].mxu0
    %v1018 = vpop.f32.mrb[0].mxu0
    %v1019 = vadd.f32 %v971, %v1018
    %v1020 = vpop.f32.mrb[0].mxu0
    %1021 = vmatprep.mubr.bf16.mxu0 0
    %1022 = vmatmul.mubr.bf16.gmra.mrb[0].mxu0 %v365
    %v1023 = vpop.f32.mrb[0].mxu0
    %v1024 = vadd.f32 %v971, %v1023
    %v1025 = vpop.f32.mrb[0].mxu0
    %v1026 = vpop.f32.mrb[0].mxu0
    %v1027 = vadd.f32 %v971, %v1026
    %v1028 = vpop.f32.mrb[0].mxu0
    %1029 = vmatprep.mubr.bf16.mxu0 0
    %1030 = vmatmul.mubr.bf16.gmra.mrb[0].mxu0 %v366
    %v1031 = vpop.f32.mrb[0].mxu0
    %v1032 = vadd.f32 %v971, %v1031
    %v1033 = vpop.f32.mrb[0].mxu0
    %v1034 = vpop.f32.mrb[0].mxu0
    %v1035 = vadd.f32 %v971, %v1034
    %v1036 = vpop.f32.mrb[0].mxu0
    %1037 = vmatprep.mubr.bf16.mxu0 0
    %1038 = vmatmul.mubr.bf16.gmra.mrb[0].mxu0 %v367
    %v1039 = vpop.f32.mrb[0].mxu0
    %v1040 = vadd.f32 %v971, %v1039
    %v1041 = vpop.f32.mrb[0].mxu0
    %v1042 = vpop.f32.mrb[0].mxu0
    %v1043 = vadd.f32 %v971, %v1042
    %v1044 = vpop.f32.mrb[0].mxu0
    %1045 = vmatprep.mubr.bf16.mxu0 0
    %1046 = vmatmul.mubr.bf16.gmra.mrb[0].mxu0 %v368
    %v1047 = vpop.f32.mrb[0].mxu0
    %v1048 = vadd.f32 %v971, %v1047
    %v1049 = vpop.f32.mrb[0].mxu0
    %v1050 = vpop.f32.mrb[0].mxu0
    %v1051 = vadd.f32 %v971, %v1050
    %v1052 = vpop.f32.mrb[0].mxu0
    %1053 = vmatprep.mubr.bf16.mxu0 0
    %1054 = vmatmul.mubr.bf16.gmra.mrb[0].mxu0 %v369
    %v1055 = vpop.f32.mrb[0].mxu0
    %v1056 = vadd.f32 %v971, %v1055
    %v1057 = vpop.f32.mrb[0].mxu0
    %v1058 = vpop.f32.mrb[0].mxu0
    %v1059 = vadd.f32 %v971, %v1058
    %v1060 = vpop.f32.mrb[0].mxu0
    %1061 = vmatprep.mubr.bf16.mxu0 0
    %1062 = vmatmul.mubr.bf16.gmra.mrb[0].mxu0 %v370
    %v1063 = vpop.f32.mrb[0].mxu0
    %v1064 = vadd.f32 %v971, %v1063
    %v1065 = vpop.f32.mrb[0].mxu0
    %v1066 = vpop.f32.mrb[0].mxu0
    %v1067 = vadd.f32 %v971, %v1066
    %v1068 = vpop.f32.mrb[0].mxu0
    %1069 = vdwg.mxu0
    %v1070 = vmax.f32 %v1008, 0.0
    %v1071 = vmax.f32 %v1011, 0.0
    %v1072 = vmax.f32 %v1016, 0.0
    %v1073 = vmax.f32 %v1019, 0.0
    %v1074 = vmax.f32 %v1024, 0.0
    %v1075 = vmax.f32 %v1027, 0.0
    %v1076 = vmax.f32 %v1032, 0.0
    %v1077 = vmax.f32 %v1035, 0.0
    %v1078 = vmax.f32 %v1040, 0.0
    %v1079 = vmax.f32 %v1043, 0.0
    %v1080 = vmax.f32 %v1048, 0.0
    %v1081 = vmax.f32 %v1051, 0.0
    %v1082 = vmax.f32 %v1056, 0.0
    %v1083 = vmax.f32 %v1059, 0.0
    %v1084 = vmax.f32 %v1064, 0.0
    %v1085 = vmax.f32 %v1067, 0.0
    %v1086 = vpack.c.bf16 %v1071, %v1070
    %v1087 = vpack.c.bf16 %v1073, %v1072
    %v1088 = vpack.c.bf16 %v1075, %v1074
    %v1089 = vpack.c.bf16 %v1077, %v1076
    %v1090 = vpack.c.bf16 %v1079, %v1078
    %v1091 = vpack.c.bf16 %v1081, %v1080
    %v1092 = vpack.c.bf16 %v1083, %v1082
    %v1093 = vpack.c.bf16 %v1085, %v1084
    %v1094 = vld [vmem:[#allocation4] sm:$0xf]
    %v1095 = vld [vmem:[#allocation4 + $0x4] sm:$0xf]
    %v1096 = vld [vmem:[#allocation4 + $0x8] sm:$0xf]
    %v1097 = vld [vmem:[#allocation4 + $0xc] sm:$0xf]
    %v1098 = vld [vmem:[#allocation4 + $0x10] sm:$0xf]
    %v1099 = vld [vmem:[#allocation4 + $0x14] sm:$0xf]
    %v1100 = vld [vmem:[#allocation4 + $0x18] sm:$0xf]
    %v1101 = vld [vmem:[#allocation4 + $0x1c] sm:$0xf]
    %v1102 = vld [vmem:[#allocation4 + $0x20] sm:$0xf]
    %v1103 = vld [vmem:[#allocation4 + $0x24] sm:$0xf]
    %v1104 = vld [vmem:[#allocation4 + $0x28] sm:$0xf]
    %v1105 = vld [vmem:[#allocation4 + $0x2c] sm:$0xf]
    %v1106 = vld [vmem:[#allocation4 + $0x30] sm:$0xf]
    %v1107 = vld [vmem:[#allocation4 + $0x34] sm:$0xf]
    %v1108 = vld [vmem:[#allocation4 + $0x38] sm:$0xf]
    %v1109 = vld [vmem:[#allocation4 + $0x3c] sm:$0xf]
    %v1126 = vunpack.c.l.b16 %v1094
    %v1127 = vunpack.c.l.b16 %v1095
    %v1128 = vunpack.c.l.b16 %v1096
    %v1129 = vunpack.c.l.b16 %v1097
    %v1130 = vunpack.c.l.b16 %v1098
    %v1131 = vunpack.c.l.b16 %v1099
    %v1132 = vunpack.c.l.b16 %v1100
    %v1133 = vunpack.c.l.b16 %v1101
    %v1134 = vunpack.c.l.b16 %v1102
    %v1135 = vunpack.c.l.b16 %v1103
    %v1136 = vunpack.c.l.b16 %v1104
    %v1137 = vunpack.c.l.b16 %v1105
    %v1138 = vunpack.c.l.b16 %v1106
    %v1139 = vunpack.c.l.b16 %v1107
    %v1140 = vunpack.c.l.b16 %v1108
    %v1141 = vunpack.c.l.b16 %v1109
    %v1142 = vpack.c.b16 %v1127, %v1126
    %v1143 = vpack.c.b16 %v1129, %v1128
    %v1144 = vpack.c.b16 %v1131, %v1130
    %v1145 = vpack.c.b16 %v1133, %v1132
    %v1146 = vpack.c.b16 %v1135, %v1134
    %v1147 = vpack.c.b16 %v1137, %v1136
    %v1148 = vpack.c.b16 %v1139, %v1138
    %v1149 = vpack.c.b16 %v1141, %v1140
    %1158 = vmatprep.subr.bf16.mxu0 0
    %1159 = vmatpush1.bf16.msra.mxu0 %v1142
    %1160 = vmatprep.subr.bf16.mxu0 0
    %1161 = vmatpush1.bf16.msra.mxu0 %v1143
    %1162 = vmatprep.subr.bf16.mxu0 0
    %1163 = vmatpush1.bf16.msra.mxu0 %v1144
    %1164 = vmatprep.subr.bf16.mxu0 0
    %1165 = vmatpush1.bf16.msra.mxu0 %v1145
    %1166 = vmatprep.subr.bf16.mxu0 0
    %1167 = vmatpush1.bf16.msra.mxu0 %v1146
    %1168 = vmatprep.subr.bf16.mxu0 0
    %1169 = vmatpush1.bf16.msra.mxu0 %v1147
    %1170 = vmatprep.subr.bf16.mxu0 0
    %1171 = vmatpush1.bf16.msra.mxu0 %v1148
    %1172 = vmatprep.subr.bf16.mxu0 0
    %1173 = vmatpush1.bf16.msra.mxu0 %v1149
    %1174 = vmatprep.subr.bf16.mxu0 0
    %1175 = vmatpush1.bf16.msra.mxu0 0
    %1176 = vmatprep.subr.bf16.mxu0 0
    %1177 = vmatpush1.bf16.msra.mxu0 0
    %1178 = vmatprep.subr.bf16.mxu0 0
    %1179 = vmatpush1.bf16.msra.mxu0 0
    %1180 = vmatprep.subr.bf16.mxu0 0
    %1181 = vmatpush1.bf16.msra.mxu0 0
    %1182 = vmatprep.subr.bf16.mxu0 0
    %1183 = vmatpush1.bf16.msra.mxu0 0
    %1184 = vmatprep.subr.bf16.mxu0 0
    %1185 = vmatpush1.bf16.msra.mxu0 0
    %1186 = vmatprep.subr.bf16.mxu0 0
    %1187 = vmatpush1.bf16.msra.mxu0 0
    %1188 = vmatprep.subr.bf16.mxu0 0
    %1189 = vmatpush1.bf16.msra.mxu0 0
    %1190 = vmatprep.mubr.bf16.mxu0 0
    %1191 = vmatmul.mubr.bf16.gmra.mrb[0].mxu0 %v1086
    %v1192 = vpop.f32.mrb[0].mxu0
    %v1193 = vadd.f32 0.0, %v1192
    %v1194 = vpop.f32.mrb[0].mxu0
    %v1195 = vpop.f32.mrb[0].mxu0
    %v1196 = vadd.f32 0.0, %v1195
    %v1197 = vpop.f32.mrb[0].mxu0
    %1198 = vmatprep.mubr.bf16.mxu0 0
    %1199 = vmatmul.mubr.bf16.gmra.mrb[0].mxu0 %v1087
    %v1200 = vpop.f32.mrb[0].mxu0
    %v1201 = vadd.f32 0.0, %v1200
    %v1202 = vpop.f32.mrb[0].mxu0
    %v1203 = vpop.f32.mrb[0].mxu0
    %v1204 = vadd.f32 0.0, %v1203
    %v1205 = vpop.f32.mrb[0].mxu0
    %1206 = vmatprep.mubr.bf16.mxu0 0
    %1207 = vmatmul.mubr.bf16.gmra.mrb[0].mxu0 %v1088
    %v1208 = vpop.f32.mrb[0].mxu0
    %v1209 = vadd.f32 0.0, %v1208
    %v1210 = vpop.f32.mrb[0].mxu0
    %v1211 = vpop.f32.mrb[0].mxu0
    %v1212 = vadd.f32 0.0, %v1211
    %v1213 = vpop.f32.mrb[0].mxu0
    %1214 = vmatprep.mubr.bf16.mxu0 0
    %1215 = vmatmul.mubr.bf16.gmra.mrb[0].mxu0 %v1089
    %v1216 = vpop.f32.mrb[0].mxu0
    %v1217 = vadd.f32 0.0, %v1216
    %v1218 = vpop.f32.mrb[0].mxu0
    %v1219 = vpop.f32.mrb[0].mxu0
    %v1220 = vadd.f32 0.0, %v1219
    %v1221 = vpop.f32.mrb[0].mxu0
    %1222 = vmatprep.mubr.bf16.mxu0 0
    %1223 = vmatmul.mubr.bf16.gmra.mrb[0].mxu0 %v1090
    %v1224 = vpop.f32.mrb[0].mxu0
    %v1225 = vadd.f32 0.0, %v1224
    %v1226 = vpop.f32.mrb[0].mxu0
    %v1227 = vpop.f32.mrb[0].mxu0
    %v1228 = vadd.f32 0.0, %v1227
    %v1229 = vpop.f32.mrb[0].mxu0
    %1230 = vmatprep.mubr.bf16.mxu0 0
    %1231 = vmatmul.mubr.bf16.gmra.mrb[0].mxu0 %v1091
    %v1232 = vpop.f32.mrb[0].mxu0
    %v1233 = vadd.f32 0.0, %v1232
    %v1234 = vpop.f32.mrb[0].mxu0
    %v1235 = vpop.f32.mrb[0].mxu0
    %v1236 = vadd.f32 0.0, %v1235
    %v1237 = vpop.f32.mrb[0].mxu0
    %1238 = vmatprep.mubr.bf16.mxu0 0
    %1239 = vmatmul.mubr.bf16.gmra.mrb[0].mxu0 %v1092
    %v1240 = vpop.f32.mrb[0].mxu0
    %v1241 = vadd.f32 0.0, %v1240
    %v1242 = vpop.f32.mrb[0].mxu0
    %v1243 = vpop.f32.mrb[0].mxu0
    %v1244 = vadd.f32 0.0, %v1243
    %v1245 = vpop.f32.mrb[0].mxu0
    %1246 = vmatprep.mubr.bf16.mxu0 0
    %1247 = vmatmul.mubr.bf16.gmra.mrb[0].mxu0 %v1093
    %v1248 = vpop.f32.mrb[0].mxu0
    %v1249 = vadd.f32 0.0, %v1248
    %v1250 = vpop.f32.mrb[0].mxu0
    %v1251 = vpop.f32.mrb[0].mxu0
    %v1252 = vadd.f32 0.0, %v1251
    %v1253 = vpop.f32.mrb[0].mxu0
    %1254 = vdwg.mxu0
    %v1255 = vpack.c.bf16 %v1196, %v1193
    %v1256 = vpack.c.bf16 %v1204, %v1201
    %v1257 = vpack.c.bf16 %v1212, %v1209
    %v1258 = vpack.c.bf16 %v1220, %v1217
    %v1259 = vpack.c.bf16 %v1228, %v1225
    %v1260 = vpack.c.bf16 %v1236, %v1233
    %v1261 = vpack.c.bf16 %v1244, %v1241
    %v1262 = vpack.c.bf16 %v1252, %v1249
    %v1263 = vld [vmem:[#allocation6] sm:$0x1]
    %v1265 = vlaneseq
    %v1266 = vshrl.u32 %v1265, 7
    %v1267 = vsub.s32 0, %v1266
    %v1268 = vrot.slane %v1263, %v1267
    %1270 = vmatprep.subr.bf16.mxu0 0
    %1271 = vmatpush1.bf16.msra.mxu0 %v1255
    %1272 = vmatprep.subr.bf16.mxu0 0
    %1273 = vmatpush1.bf16.msra.mxu0 %v1256
    %1274 = vmatprep.subr.bf16.mxu0 0
    %1275 = vmatpush1.bf16.msra.mxu0 %v1257
    %1276 = vmatprep.subr.bf16.mxu0 0
    %1277 = vmatpush1.bf16.msra.mxu0 %v1258
    %1278 = vmatprep.subr.bf16.mxu0 0
    %1279 = vmatpush1.bf16.msra.mxu0 %v1259
    %1280 = vmatprep.subr.bf16.mxu0 0
    %1281 = vmatpush1.bf16.msra.mxu0 %v1260
    %1282 = vmatprep.subr.bf16.mxu0 0
    %1283 = vmatpush1.bf16.msra.mxu0 %v1261
    %1284 = vmatprep.subr.bf16.mxu0 0
    %1285 = vmatpush1.bf16.msra.mxu0 %v1262
    %1286 = vmatprep.subr.bf16.mxu0 0
    %1287 = vmatpush1.bf16.msra.mxu0 0
    %1288 = vmatprep.subr.bf16.mxu0 0
    %1289 = vmatpush1.bf16.msra.mxu0 0
    %1290 = vmatprep.subr.bf16.mxu0 0
    %1291 = vmatpush1.bf16.msra.mxu0 0
    %1292 = vmatprep.subr.bf16.mxu0 0
    %1293 = vmatpush1.bf16.msra.mxu0 0
    %1294 = vmatprep.subr.bf16.mxu0 0
    %1295 = vmatpush1.bf16.msra.mxu0 0
    %1296 = vmatprep.subr.bf16.mxu0 0
    %1297 = vmatpush1.bf16.msra.mxu0 0
    %1298 = vmatprep.subr.bf16.mxu0 0
    %1299 = vmatpush1.bf16.msra.mxu0 0
    %1300 = vmatprep.subr.bf16.mxu0 0
    %1301 = vmatpush1.bf16.msra.mxu0 0
    %1302 = vmatprep.mubr.bf16.mxu0 0
    %1303 = vmatmul.mubr.bf16.gmra.mrb[0].mxu0 %v363
    %v1304 = vpop.f32.mrb[0].mxu0
    %v1305 = vadd.f32 %v1268, %v1304
    %v1306 = vpop.f32.mrb[0].mxu0
    %v1307 = vpop.f32.mrb[0].mxu0
    %v1308 = vadd.f32 %v1268, %v1307
    %v1309 = vpop.f32.mrb[0].mxu0
    %1310 = vmatprep.mubr.bf16.mxu0 0
    %1311 = vmatmul.mubr.bf16.gmra.mrb[0].mxu0 %v364
    %v1312 = vpop.f32.mrb[0].mxu0
    %v1313 = vadd.f32 %v1268, %v1312
    %v1314 = vpop.f32.mrb[0].mxu0
    %v1315 = vpop.f32.mrb[0].mxu0
    %v1316 = vadd.f32 %v1268, %v1315
    %v1317 = vpop.f32.mrb[0].mxu0
    %1318 = vmatprep.mubr.bf16.mxu0 0
    %1319 = vmatmul.mubr.bf16.gmra.mrb[0].mxu0 %v365
    %v1320 = vpop.f32.mrb[0].mxu0
    %v1321 = vadd.f32 %v1268, %v1320
    %v1322 = vpop.f32.mrb[0].mxu0
    %v1323 = vpop.f32.mrb[0].mxu0
    %v1324 = vadd.f32 %v1268, %v1323
    %v1325 = vpop.f32.mrb[0].mxu0
    %1326 = vmatprep.mubr.bf16.mxu0 0
    %1327 = vmatmul.mubr.bf16.gmra.mrb[0].mxu0 %v366
    %v1328 = vpop.f32.mrb[0].mxu0
    %v1329 = vadd.f32 %v1268, %v1328
    %v1330 = vpop.f32.mrb[0].mxu0
    %v1331 = vpop.f32.mrb[0].mxu0
    %v1332 = vadd.f32 %v1268, %v1331
    %v1333 = vpop.f32.mrb[0].mxu0
    %1334 = vmatprep.mubr.bf16.mxu0 0
    %1335 = vmatmul.mubr.bf16.gmra.mrb[0].mxu0 %v367
    %v1336 = vpop.f32.mrb[0].mxu0
    %v1337 = vadd.f32 %v1268, %v1336
    %v1338 = vpop.f32.mrb[0].mxu0
    %v1339 = vpop.f32.mrb[0].mxu0
    %v1340 = vadd.f32 %v1268, %v1339
    %v1341 = vpop.f32.mrb[0].mxu0
    %1342 = vmatprep.mubr.bf16.mxu0 0
    %1343 = vmatmul.mubr.bf16.gmra.mrb[0].mxu0 %v368
    %v1344 = vpop.f32.mrb[0].mxu0
    %v1345 = vadd.f32 %v1268, %v1344
    %v1346 = vpop.f32.mrb[0].mxu0
    %v1347 = vpop.f32.mrb[0].mxu0
    %v1348 = vadd.f32 %v1268, %v1347
    %v1349 = vpop.f32.mrb[0].mxu0
    %1350 = vmatprep.mubr.bf16.mxu0 0
    %1351 = vmatmul.mubr.bf16.gmra.mrb[0].mxu0 %v369
    %v1352 = vpop.f32.mrb[0].mxu0
    %v1353 = vadd.f32 %v1268, %v1352
    %v1354 = vpop.f32.mrb[0].mxu0
    %v1355 = vpop.f32.mrb[0].mxu0
    %v1356 = vadd.f32 %v1268, %v1355
    %v1357 = vpop.f32.mrb[0].mxu0
    %1358 = vmatprep.mubr.bf16.mxu0 0
    %1359 = vmatmul.mubr.bf16.gmra.mrb[0].mxu0 %v370
    %v1360 = vpop.f32.mrb[0].mxu0
    %v1361 = vadd.f32 %v1268, %v1360
    %v1362 = vpop.f32.mrb[0].mxu0
    %v1363 = vpop.f32.mrb[0].mxu0
    %v1364 = vadd.f32 %v1268, %v1363
    %v1365 = vpop.f32.mrb[0].mxu0
    %1366 = vdwg.mxu0
    %1367 = vst [vmem:[%s10] sm:$0xff] %v1305
    %1368 = vst [vmem:[%s10 + $0x8] sm:$0xff] %v1308
    %1369 = vst [vmem:[%s10 + $0x10] sm:$0xff] %v1313
    %1370 = vst [vmem:[%s10 + $0x18] sm:$0xff] %v1316
    %1371 = vst [vmem:[%s10 + $0x20] sm:$0xff] %v1321
    %1372 = vst [vmem:[%s10 + $0x28] sm:$0xff] %v1324
    %1373 = vst [vmem:[%s10 + $0x30] sm:$0xff] %v1329
    %1374 = vst [vmem:[%s10 + $0x38] sm:$0xff] %v1332
    %1375 = vst [vmem:[%s10 + $0x40] sm:$0xff] %v1337
    %1376 = vst [vmem:[%s10 + $0x48] sm:$0xff] %v1340
    %1377 = vst [vmem:[%s10 + $0x50] sm:$0xff] %v1345
    %1378 = vst [vmem:[%s10 + $0x58] sm:$0xff] %v1348
    %1379 = vst [vmem:[%s10 + $0x60] sm:$0xff] %v1353
    %1380 = vst [vmem:[%s10 + $0x68] sm:$0xff] %v1356
    %1381 = vst [vmem:[%s10 + $0x70] sm:$0xff] %v1361
    %1382 = vst [vmem:[%s10 + $0x78] sm:$0xff] %v1364
    // Predicated region
    $region54: #{forward.1} parent=1 // pred_check
      _
    $region55: #{forward.1} parent=1 // pred_check_branch
      %1384 = sbr.rel (0) target = $region57
    $region56: #{forward.1} parent=1 // pred_region
      _
    $region57: #{forward.1} parent=1 // pred_fallthru
      _
    // Predicated region
    $region58: #{forward.1} parent=1 // pred_check
      _
    $region59: #{forward.1} parent=1 // pred_check_branch
      %1386 = sbr.rel (0) target = $region61
    $region60: #{forward.1} parent=1 // pred_region
      _
    $region61: #{forward.1} parent=1 // pred_fallthru
      _
    %1387 = vsyncpa [#allocation3], 1
    %1388 = vsyncpa [#allocation5], 1

</llo_original>
